<compile_context>
chip_gen: v5e
topology: v5e:2x2
jax: 0.10.0
libtpu: 0.0.40
codegen_flags: <defaults>
</compile_context>

<pallas_src>
import functools

import jax
import jax.numpy as jnp
from jax import lax
from jax.experimental import pallas as pl
from jax.experimental.pallas import tpu as pltpu


def upe_kernel(idx_ref, y_ref, lam_ref, u_ref, table_ref, out_ref, *, n_sel):
    # idx_ref   : SMEM (n_sel,) int32        -- selected item ids
    # y_ref     : SMEM (n_sel,) f32          -- binary targets ("matrix")
    # lam_ref   : SMEM (1,) f32              -- lam_u
    # u_ref     : VMEM (1, D) f32            -- user embedding
    # table_ref : VMEM (num_items, D) f32    -- full item-embedding table
    # out_ref   : SMEM (1, 1) f32            -- scalar loss
    num_items = table_ref.shape[0]

    u = u_ref[...]                                            # (1, D)
    table = table_ref[...]                                    # (I, D)

    # Logits for ALL items in one vectorized VPU pass (lane reduce over D).
    z_all = jnp.sum(table * u, axis=-1, keepdims=True)        # (I, 1)

    # Per-item selection multiplicity and target sums. Summing per-selection
    # one-hots preserves duplicate indices (each with its own target).
    iota = lax.broadcasted_iota(jnp.int32, (num_items, 1), 0)  # (I, 1)
    cnt = jnp.zeros((num_items, 1), jnp.float32)
    tgt = jnp.zeros((num_items, 1), jnp.float32)
    for i in range(n_sel):                                     # static unroll
        m = (iota == idx_ref[i]).astype(jnp.float32)           # (I, 1) one-hot
        cnt = cnt + m
        tgt = tgt + m * y_ref[i]

    # BCEWithLogitsLoss(reduction='sum'), numerically-stable form, grouped by
    # item:  sum_i [max(z,0) - z*y + log1p(exp(-|z|))]
    #      = sum_j [cnt_j*(max(z_j,0) + log1p(exp(-|z_j|))) - z_j*tgt_j]
    stable = jnp.maximum(z_all, 0.0) + jnp.log1p(jnp.exp(-jnp.abs(z_all)))
    pred_err = jnp.sum(cnt * stable - z_all * tgt)

    # lam_u * ||user_embeddings||_F
    u_norm = jnp.sqrt(jnp.sum(u * u))
    out_ref[0, 0] = pred_err + lam_ref[0] * u_norm


def user_preference_estimator_forward(user_emb, item_emb, item_idx, matrix, lam_u):
    """JAX wrapper: gather-free (compute-all-then-select) fused loss kernel."""
    num_items, embed_dim = item_emb.shape
    n_sel = int(item_idx.shape[0])

    idx = item_idx.astype(jnp.int32)
    y = matrix.astype(jnp.float32).reshape(n_sel)
    lam = jnp.asarray([lam_u], dtype=jnp.float32)

    kernel = functools.partial(upe_kernel, n_sel=n_sel)

    out = pl.pallas_call(
        kernel,
        out_shape=jax.ShapeDtypeStruct((1, 1), jnp.float32),
        in_specs=[
            pl.BlockSpec(memory_space=pltpu.MemorySpace.SMEM),  # item_idx (N,)
            pl.BlockSpec(memory_space=pltpu.MemorySpace.SMEM),  # targets  (N,)
            pl.BlockSpec(memory_space=pltpu.MemorySpace.SMEM),  # lam_u    (1,)
            pl.BlockSpec(memory_space=pltpu.MemorySpace.VMEM),  # user_emb (1, D)
            pl.BlockSpec(memory_space=pltpu.MemorySpace.VMEM),  # table    (I, D)
        ],
        out_specs=pl.BlockSpec(memory_space=pltpu.MemorySpace.SMEM),
    )(idx, y, lam, user_emb.astype(jnp.float32), item_emb.astype(jnp.float32))
    return out[0, 0]


def _reference(user_emb, item_emb, item_idx, matrix, lam_u):
    """Pure-JAX reference mirroring the PyTorch forward."""
    predicted = user_emb @ item_emb[item_idx].T       # (1, N)
    z = predicted[0]
    y = matrix
    bce = jnp.maximum(z, 0.0) - z * y + jnp.log1p(jnp.exp(-jnp.abs(z)))
    return jnp.sum(bce) + lam_u * jnp.sqrt(jnp.sum(user_emb * user_emb))


if __name__ == "__main__":
    key = jax.random.PRNGKey(0)
    k_user, k_items, k_idx, k_mat = jax.random.split(key, 4)

    num_items, embed_dim, n_sel = 64, 32, 8
    lam_u = 0.01

    # Deterministic synthetic parameters (mirrors __init__ shapes).
    user_emb = 0.01 * jax.random.normal(k_user, (1, embed_dim), dtype=jnp.float32)
    item_emb = jax.random.normal(k_items, (num_items, embed_dim), dtype=jnp.float32)

    # Forward inputs: selected item indices (with possible duplicates) and
    # binary interaction targets.
    item_idx = jax.random.randint(k_idx, (n_sel,), 0, num_items)
    matrix = jax.random.bernoulli(k_mat, 0.5, (n_sel,)).astype(jnp.float32)

    loss = user_preference_estimator_forward(user_emb, item_emb, item_idx, matrix, lam_u)
    loss = jax.block_until_ready(loss)

    ref = _reference(user_emb, item_emb, item_idx, matrix, lam_u)
    assert jnp.allclose(loss, ref, rtol=1e-5, atol=1e-5), (loss, ref)

    print("KERNEL_OK")
</pallas_src>

<mosaic_0001>
module attributes {stable_mosaic.version = 11 : i64} {
  func.func @upe_kernel(%arg0: memref<8xi32, #tpu.memory_space<smem>>, %arg1: memref<8xf32, #tpu.memory_space<smem>>, %arg2: memref<1xf32, #tpu.memory_space<smem>>, %arg3: memref<1x32xf32, #tpu.memory_space<vmem>>, %arg4: memref<64x32xf32, #tpu.memory_space<vmem>>, %arg5: memref<1x1xf32, #tpu.memory_space<smem>>) attributes {dimension_semantics = [], scalar_prefetch = 0 : i64, scratch_operands = 0 : i64, tpu.core_type = #tpu.core_type<tc>} {
    %c0 = arith.constant 0 : index
    %c0_0 = arith.constant 0 : index
    %0 = vector.load %arg3[%c0, %c0_0] : memref<1x32xf32, #tpu.memory_space<vmem>>, vector<1x32xf32>
    %c0_1 = arith.constant 0 : index
    %c0_2 = arith.constant 0 : index
    %1 = vector.load %arg4[%c0_1, %c0_2] : memref<64x32xf32, #tpu.memory_space<vmem>>, vector<64x32xf32>
    %2 = vector.broadcast %0 : vector<1x32xf32> to vector<64x32xf32>
    %3 = arith.mulf %1, %2 : vector<64x32xf32>
    %cst = arith.constant dense<0.000000e+00> : vector<64xf32>
    %4 = vector.multi_reduction <add>, %3, %cst [1] : vector<64x32xf32> to vector<64xf32>
    %5 = vector.shape_cast %4 : vector<64xf32> to vector<64x1xf32>
    %6 = tpu.iota {dimensions = array<i32: 0>} : vector<64x1xi32>
    %cst_3 = arith.constant 0.000000e+00 : f32
    %7 = vector.broadcast %cst_3 : f32 to vector<64x1xf32>
    %cst_4 = arith.constant 0.000000e+00 : f32
    %8 = vector.broadcast %cst_4 : f32 to vector<64x1xf32>
    %c0_5 = arith.constant 0 : index
    %9 = memref.load %arg0[%c0_5] : memref<8xi32, #tpu.memory_space<smem>>
    %10 = vector.broadcast %9 : i32 to vector<64x1xi32>
    %11 = arith.cmpi eq, %6, %10 : vector<64x1xi32>
    %12 = arith.extui %11 : vector<64x1xi1> to vector<64x1xi32>
    %13 = arith.sitofp %12 : vector<64x1xi32> to vector<64x1xf32>
    %14 = arith.addf %7, %13 : vector<64x1xf32>
    %c0_6 = arith.constant 0 : index
    %15 = memref.load %arg1[%c0_6] : memref<8xf32, #tpu.memory_space<smem>>
    %16 = vector.broadcast %15 : f32 to vector<64x1xf32>
    %17 = arith.mulf %13, %16 : vector<64x1xf32>
    %18 = arith.addf %8, %17 : vector<64x1xf32>
    %c1 = arith.constant 1 : index
    %19 = memref.load %arg0[%c1] : memref<8xi32, #tpu.memory_space<smem>>
    %20 = vector.broadcast %19 : i32 to vector<64x1xi32>
    %21 = arith.cmpi eq, %6, %20 : vector<64x1xi32>
    %22 = arith.extui %21 : vector<64x1xi1> to vector<64x1xi32>
    %23 = arith.sitofp %22 : vector<64x1xi32> to vector<64x1xf32>
    %24 = arith.addf %14, %23 : vector<64x1xf32>
    %c1_7 = arith.constant 1 : index
    %25 = memref.load %arg1[%c1_7] : memref<8xf32, #tpu.memory_space<smem>>
    %26 = vector.broadcast %25 : f32 to vector<64x1xf32>
    %27 = arith.mulf %23, %26 : vector<64x1xf32>
    %28 = arith.addf %18, %27 : vector<64x1xf32>
    %c2 = arith.constant 2 : index
    %29 = memref.load %arg0[%c2] : memref<8xi32, #tpu.memory_space<smem>>
    %30 = vector.broadcast %29 : i32 to vector<64x1xi32>
    %31 = arith.cmpi eq, %6, %30 : vector<64x1xi32>
    %32 = arith.extui %31 : vector<64x1xi1> to vector<64x1xi32>
    %33 = arith.sitofp %32 : vector<64x1xi32> to vector<64x1xf32>
    %34 = arith.addf %24, %33 : vector<64x1xf32>
    %c2_8 = arith.constant 2 : index
    %35 = memref.load %arg1[%c2_8] : memref<8xf32, #tpu.memory_space<smem>>
    %36 = vector.broadcast %35 : f32 to vector<64x1xf32>
    %37 = arith.mulf %33, %36 : vector<64x1xf32>
    %38 = arith.addf %28, %37 : vector<64x1xf32>
    %c3 = arith.constant 3 : index
    %39 = memref.load %arg0[%c3] : memref<8xi32, #tpu.memory_space<smem>>
    %40 = vector.broadcast %39 : i32 to vector<64x1xi32>
    %41 = arith.cmpi eq, %6, %40 : vector<64x1xi32>
    %42 = arith.extui %41 : vector<64x1xi1> to vector<64x1xi32>
    %43 = arith.sitofp %42 : vector<64x1xi32> to vector<64x1xf32>
    %44 = arith.addf %34, %43 : vector<64x1xf32>
    %c3_9 = arith.constant 3 : index
    %45 = memref.load %arg1[%c3_9] : memref<8xf32, #tpu.memory_space<smem>>
    %46 = vector.broadcast %45 : f32 to vector<64x1xf32>
    %47 = arith.mulf %43, %46 : vector<64x1xf32>
    %48 = arith.addf %38, %47 : vector<64x1xf32>
    %c4 = arith.constant 4 : index
    %49 = memref.load %arg0[%c4] : memref<8xi32, #tpu.memory_space<smem>>
    %50 = vector.broadcast %49 : i32 to vector<64x1xi32>
    %51 = arith.cmpi eq, %6, %50 : vector<64x1xi32>
    %52 = arith.extui %51 : vector<64x1xi1> to vector<64x1xi32>
    %53 = arith.sitofp %52 : vector<64x1xi32> to vector<64x1xf32>
    %54 = arith.addf %44, %53 : vector<64x1xf32>
    %c4_10 = arith.constant 4 : index
    %55 = memref.load %arg1[%c4_10] : memref<8xf32, #tpu.memory_space<smem>>
    %56 = vector.broadcast %55 : f32 to vector<64x1xf32>
    %57 = arith.mulf %53, %56 : vector<64x1xf32>
    %58 = arith.addf %48, %57 : vector<64x1xf32>
    %c5 = arith.constant 5 : index
    %59 = memref.load %arg0[%c5] : memref<8xi32, #tpu.memory_space<smem>>
    %60 = vector.broadcast %59 : i32 to vector<64x1xi32>
    %61 = arith.cmpi eq, %6, %60 : vector<64x1xi32>
    %62 = arith.extui %61 : vector<64x1xi1> to vector<64x1xi32>
    %63 = arith.sitofp %62 : vector<64x1xi32> to vector<64x1xf32>
    %64 = arith.addf %54, %63 : vector<64x1xf32>
    %c5_11 = arith.constant 5 : index
    %65 = memref.load %arg1[%c5_11] : memref<8xf32, #tpu.memory_space<smem>>
    %66 = vector.broadcast %65 : f32 to vector<64x1xf32>
    %67 = arith.mulf %63, %66 : vector<64x1xf32>
    %68 = arith.addf %58, %67 : vector<64x1xf32>
    %c6 = arith.constant 6 : index
    %69 = memref.load %arg0[%c6] : memref<8xi32, #tpu.memory_space<smem>>
    %70 = vector.broadcast %69 : i32 to vector<64x1xi32>
    %71 = arith.cmpi eq, %6, %70 : vector<64x1xi32>
    %72 = arith.extui %71 : vector<64x1xi1> to vector<64x1xi32>
    %73 = arith.sitofp %72 : vector<64x1xi32> to vector<64x1xf32>
    %74 = arith.addf %64, %73 : vector<64x1xf32>
    %c6_12 = arith.constant 6 : index
    %75 = memref.load %arg1[%c6_12] : memref<8xf32, #tpu.memory_space<smem>>
    %76 = vector.broadcast %75 : f32 to vector<64x1xf32>
    %77 = arith.mulf %73, %76 : vector<64x1xf32>
    %78 = arith.addf %68, %77 : vector<64x1xf32>
    %c7 = arith.constant 7 : index
    %79 = memref.load %arg0[%c7] : memref<8xi32, #tpu.memory_space<smem>>
    %80 = vector.broadcast %79 : i32 to vector<64x1xi32>
    %81 = arith.cmpi eq, %6, %80 : vector<64x1xi32>
    %82 = arith.extui %81 : vector<64x1xi1> to vector<64x1xi32>
    %83 = arith.sitofp %82 : vector<64x1xi32> to vector<64x1xf32>
    %84 = arith.addf %74, %83 : vector<64x1xf32>
    %c7_13 = arith.constant 7 : index
    %85 = memref.load %arg1[%c7_13] : memref<8xf32, #tpu.memory_space<smem>>
    %86 = vector.broadcast %85 : f32 to vector<64x1xf32>
    %87 = arith.mulf %83, %86 : vector<64x1xf32>
    %88 = arith.addf %78, %87 : vector<64x1xf32>
    %cst_14 = arith.constant 0.000000e+00 : f32
    %89 = vector.broadcast %cst_14 : f32 to vector<64x1xf32>
    %90 = arith.maximumf %5, %89 : vector<64x1xf32>
    %91 = math.absf %5 : vector<64x1xf32>
    %cst_15 = arith.constant 0.000000e+00 : f32
    %92 = vector.broadcast %cst_15 : f32 to vector<64x1xf32>
    %93 = arith.subf %92, %91 : vector<64x1xf32>
    %94 = math.exp %93 : vector<64x1xf32>
    %95 = math.log1p %94 : vector<64x1xf32>
    %96 = arith.addf %90, %95 : vector<64x1xf32>
    %97 = arith.mulf %84, %96 : vector<64x1xf32>
    %98 = arith.mulf %5, %88 : vector<64x1xf32>
    %99 = arith.subf %97, %98 : vector<64x1xf32>
    %100 = vector.shape_cast %99 : vector<64x1xf32> to vector<1x64x1xf32>
    %cst_16 = arith.constant dense<0.000000e+00> : vector<1xf32>
    %101 = vector.multi_reduction <add>, %100, %cst_16 [1, 2] : vector<1x64x1xf32> to vector<1xf32>
    %102 = vector.shape_cast %101 : vector<1xf32> to vector<1x1x1xf32>
    %103 = vector.extract %102[0, 0, 0] : f32 from vector<1x1x1xf32>
    %104 = arith.mulf %0, %0 : vector<1x32xf32>
    %105 = vector.shape_cast %104 : vector<1x32xf32> to vector<1x1x32xf32>
    %cst_17 = arith.constant dense<0.000000e+00> : vector<1xf32>
    %106 = vector.multi_reduction <add>, %105, %cst_17 [1, 2] : vector<1x1x32xf32> to vector<1xf32>
    %107 = vector.shape_cast %106 : vector<1xf32> to vector<1x1x1xf32>
    %108 = vector.extract %107[0, 0, 0] : f32 from vector<1x1x1xf32>
    %109 = math.sqrt %108 : f32
    %c0_18 = arith.constant 0 : index
    %110 = memref.load %arg2[%c0_18] : memref<1xf32, #tpu.memory_space<smem>>
    %111 = arith.mulf %110, %109 : f32
    %112 = arith.addf %103, %111 : f32
    %c0_19 = arith.constant 0 : index
    %c0_20 = arith.constant 0 : index
    %113 = memref.load %arg5[%c0_19, %c0_20] : memref<1x1xf32, #tpu.memory_space<smem>>
    memref.store %112, %arg5[%c0_19, %c0_20] : memref<1x1xf32, #tpu.memory_space<smem>>
    return
  }
}

</mosaic_0001>

<llo_original>
// kernel: tpu_custom_call.1
$region0: #{tpu_custom_call.1}
  #allocation0 [shape = 'u32[]', space=smem, size = 0x4, offset = 0x4, fixed_abs, tag = 'smem constant byte address 0x4 - core index']
  #allocation1 [shape = 'u32[72,128]{1,0:T(1,128)}', space=vmem, size = 0x9000, scoped, tag = 'internal scratch']
  #allocation2 [shape = 'f32[1]{0:T(128)S(6)}', space=smem, size = 0x200, scoped, tag = 'scoped memory for tpu_custom_call.1']
  %s0 = inlined_call_operand.vmem [shape: s32[8], index: 0, kind: input, shape index: {}]
  %s1 = inlined_call_operand.vmem [shape: f32[8], index: 1, kind: input, shape index: {}]
  %s2 = inlined_call_operand.<no memory space> [shape: f32[1], index: 2, kind: input, shape index: {}]
  %s3 = inlined_call_operand.vmem [shape: f32[1,32], index: 3, kind: input, shape index: {}]
  %s4 = inlined_call_operand.vmem [shape: f32[64,32], index: 4, kind: input, shape index: {}]
  %s5 = inlined_call_operand.hbm [shape: f32[1,1], index: 5, kind: output, shape index: {}]
  %s6 = sld [smem:[#allocation0]]
  $region38: #{tpu_custom_call.1} parent=0
    _
  %s8 = ssub.s32 1, %s6
  %s9 = scalar_select 0, %s8, %s6
  %10 = sst [smem:[#allocation2]] %s2
  $region1: #{tpu_custom_call.1} parent=0
    #allocation3 [shape = 'u8[512]{0}', space=smem, size = 0x200, scoped, tag = 'input window, operand 0, single buffered']
    #allocation4 [shape = 's32[1]{0}', space=sflag, size = 0x4, scoped, tag = 'scoped memory for tpu_custom_call.1']
    #allocation5 [shape = 's32[1]{0}', space=sflag, size = 0x4, scoped, tag = 'scoped memory for tpu_custom_call.1']
    #allocation6 [shape = 'u8[512]{0}', space=smem, size = 0x200, scoped, tag = 'input window, operand 1, single buffered']
    #allocation7 [shape = 's32[1]{0}', space=sflag, size = 0x4, scoped, tag = 'scoped memory for tpu_custom_call.1']
    #allocation8 [shape = 'u8[512]{0}', space=smem, size = 0x200, scoped, tag = 'output window, operand 0, single buffered']
    %11 = vsyncpa [#allocation5], 0
    %12 = vsyncpa [#allocation7], 0
    %13 = vsyncpa [#allocation4], 0
    // Predicated region
    $region2: #{tpu_custom_call.1} parent=1 // pred_check
      _
    $region3: #{tpu_custom_call.1} parent=1 // pred_check_branch
      %15 = sbr.rel (0) target = $region5
    $region4: #{tpu_custom_call.1} parent=1 // pred_region
      %17 = vsyncadd [#allocation5], 0
      %s19 = sshll.u32 %s0, 4
      %s20 = int_to_ptr.vmem [resolvable:$true] %s19
      %22 = dma.vmem_to_smem %s20, 16, [#allocation3], [#allocation5]
    $region5: #{tpu_custom_call.1} parent=1 // pred_fallthru
      _
    // Predicated region
    $region6: #{tpu_custom_call.1} parent=1 // pred_check
      _
    $region7: #{tpu_custom_call.1} parent=1 // pred_check_branch
      %24 = sbr.rel (0) target = $region9
    $region8: #{tpu_custom_call.1} parent=1 // pred_region
      %26 = vsyncadd [#allocation7], 0
      %s28 = sshll.u32 %s1, 4
      %s29 = int_to_ptr.vmem [resolvable:$true] %s28
      %31 = dma.vmem_to_smem %s29, 16, [#allocation6], [#allocation7]
    $region9: #{tpu_custom_call.1} parent=1 // pred_fallthru
      _
    // Predicated region
    $region10: #{tpu_custom_call.1} parent=1 // pred_check
      _
    $region11: #{tpu_custom_call.1} parent=1 // pred_check_branch
      %33 = sbr.rel (0) target = $region13
    $region12: #{tpu_custom_call.1} parent=1 // pred_region
      _
    $region13: #{tpu_custom_call.1} parent=1 // pred_fallthru
      _
    // Predicated region
    $region14: #{tpu_custom_call.1} parent=1 // pred_check
      _
    $region15: #{tpu_custom_call.1} parent=1 // pred_check_branch
      %35 = sbr.rel (0) target = $region17
    $region16: #{tpu_custom_call.1} parent=1 // pred_region
      _
    $region17: #{tpu_custom_call.1} parent=1 // pred_fallthru
      _
    // Predicated region
    $region18: #{tpu_custom_call.1} parent=1 // pred_check
      _
    $region19: #{tpu_custom_call.1} parent=1 // pred_check_branch
      %37 = sbr.rel (0) target = $region21
    $region20: #{tpu_custom_call.1} parent=1 // pred_region
      _
    $region21: #{tpu_custom_call.1} parent=1 // pred_fallthru
      _
    // Predicated region
    $region22: #{tpu_custom_call.1} parent=1 // pred_check
      _
    $region23: #{tpu_custom_call.1} parent=1 // pred_check_branch
      %39 = sbr.rel (0) target = $region25
    $region24: #{tpu_custom_call.1} parent=1 // pred_region
      %41 = dma.done [#allocation5], 16
    $region25: #{tpu_custom_call.1} parent=1 // pred_fallthru
      _
    // Predicated region
    $region26: #{tpu_custom_call.1} parent=1 // pred_check
      _
    $region27: #{tpu_custom_call.1} parent=1 // pred_check_branch
      %43 = sbr.rel (0) target = $region29
    $region28: #{tpu_custom_call.1} parent=1 // pred_region
      %45 = dma.done [#allocation7], 16
    $region29: #{tpu_custom_call.1} parent=1 // pred_fallthru
      _
    %46 = sfence
    %v47 = vld [vmem:[%s3] sm:$0x1]
    %v48 = vld [vmem:[%s4] sm:$0xff]
    %v49 = vld [vmem:[%s4 + $0x8] sm:$0xff]
    %v50 = vld [vmem:[%s4 + $0x10] sm:$0xff]
    %v51 = vld [vmem:[%s4 + $0x18] sm:$0xff]
    %v52 = vld [vmem:[%s4 + $0x20] sm:$0xff]
    %v53 = vld [vmem:[%s4 + $0x28] sm:$0xff]
    %v54 = vld [vmem:[%s4 + $0x30] sm:$0xff]
    %v55 = vld [vmem:[%s4 + $0x38] sm:$0xff]
    %v57 = vperm.slane %v47, 0
    %v59 = vmul.f32 %v48, %v57
    %v60 = vmul.f32 %v49, %v57
    %v61 = vmul.f32 %v50, %v57
    %v62 = vmul.f32 %v51, %v57
    %v63 = vmul.f32 %v52, %v57
    %v64 = vmul.f32 %v53, %v57
    %v65 = vmul.f32 %v54, %v57
    %v66 = vmul.f32 %v55, %v57
    %vm67 = vcmask 261120
    %v68 = vsel %vm67, %v59, 0.0
    %69 = vadd.xlane.f32.xlu0 %v68
    %v70 = vpop.xlane.xlu0 %69
    %v71 = vsel %vm67, %v60, 0.0
    %72 = vadd.xlane.f32.xlu0 %v71
    %v73 = vpop.xlane.xlu0 %72
    %v74 = vsel %vm67, %v61, 0.0
    %75 = vadd.xlane.f32.xlu0 %v74
    %v76 = vpop.xlane.xlu0 %75
    %v77 = vsel %vm67, %v62, 0.0
    %78 = vadd.xlane.f32.xlu0 %v77
    %v79 = vpop.xlane.xlu0 %78
    %v80 = vsel %vm67, %v63, 0.0
    %81 = vadd.xlane.f32.xlu0 %v80
    %v82 = vpop.xlane.xlu0 %81
    %v83 = vsel %vm67, %v64, 0.0
    %84 = vadd.xlane.f32.xlu0 %v83
    %v85 = vpop.xlane.xlu0 %84
    %v86 = vsel %vm67, %v65, 0.0
    %87 = vadd.xlane.f32.xlu0 %v86
    %v88 = vpop.xlane.xlu0 %87
    %v89 = vsel %vm67, %v66, 0.0
    %90 = vadd.xlane.f32.xlu0 %v89
    %v91 = vpop.xlane.xlu0 %90
    %v92 = vlaneseq
    %v93 = vshrl.u32 %v92, 7
    %v94 = vadd.s32 %v93, 8
    %v95 = vadd.s32 %v93, 16
    %v96 = vadd.s32 %v93, 24
    %v97 = vadd.s32 %v93, 32
    %v98 = vadd.s32 %v93, 40
    %v99 = vadd.s32 %v93, 48
    %v100 = vadd.s32 %v93, 56
    %s101 = sld [smem:[#allocation3]]
    %v102 = vstv %s101
    %vm103 = vcmp.eq.s32.totalorder %v93, %v102
    %vm104 = vcmp.eq.s32.totalorder %v94, %v102
    %vm105 = vcmp.eq.s32.totalorder %v95, %v102
    %vm106 = vcmp.eq.s32.totalorder %v96, %v102
    %vm107 = vcmp.eq.s32.totalorder %v97, %v102
    %vm108 = vcmp.eq.s32.totalorder %v98, %v102
    %vm109 = vcmp.eq.s32.totalorder %v99, %v102
    %vm110 = vcmp.eq.s32.totalorder %v100, %v102
    %v111 = vsel %vm103, 1, 0
    %v112 = vsel %vm104, 1, 0
    %v113 = vsel %vm105, 1, 0
    %v114 = vsel %vm106, 1, 0
    %v115 = vsel %vm107, 1, 0
    %v116 = vsel %vm108, 1, 0
    %v117 = vsel %vm109, 1, 0
    %v118 = vsel %vm110, 1, 0
    %v119 = vcvt.s32.f32 %v111
    %v120 = vcvt.s32.f32 %v112
    %v121 = vcvt.s32.f32 %v113
    %v122 = vcvt.s32.f32 %v114
    %v123 = vcvt.s32.f32 %v115
    %v124 = vcvt.s32.f32 %v116
    %v125 = vcvt.s32.f32 %v117
    %v126 = vcvt.s32.f32 %v118
    %v127 = vadd.f32 %v119, 0.0
    %v128 = vadd.f32 %v120, 0.0
    %v129 = vadd.f32 %v121, 0.0
    %v130 = vadd.f32 %v122, 0.0
    %v131 = vadd.f32 %v123, 0.0
    %v132 = vadd.f32 %v124, 0.0
    %v133 = vadd.f32 %v125, 0.0
    %v134 = vadd.f32 %v126, 0.0
    %s135 = sld [smem:[#allocation6]]
    %v136 = vstv %s135
    %v137 = vmul.f32 %v119, %v136
    %v138 = vmul.f32 %v120, %v136
    %v139 = vmul.f32 %v121, %v136
    %v140 = vmul.f32 %v122, %v136
    %v141 = vmul.f32 %v123, %v136
    %v142 = vmul.f32 %v124, %v136
    %v143 = vmul.f32 %v125, %v136
    %v144 = vmul.f32 %v126, %v136
    %v145 = vadd.f32 %v137, 0.0
    %v146 = vadd.f32 %v138, 0.0
    %v147 = vadd.f32 %v139, 0.0
    %v148 = vadd.f32 %v140, 0.0
    %v149 = vadd.f32 %v141, 0.0
    %v150 = vadd.f32 %v142, 0.0
    %v151 = vadd.f32 %v143, 0.0
    %v152 = vadd.f32 %v144, 0.0
    %s153 = sld [smem:[#allocation3 + $0x1]]
    %v154 = vstv %s153
    %vm155 = vcmp.eq.s32.totalorder %v93, %v154
    %vm156 = vcmp.eq.s32.totalorder %v94, %v154
    %vm157 = vcmp.eq.s32.totalorder %v95, %v154
    %vm158 = vcmp.eq.s32.totalorder %v96, %v154
    %vm159 = vcmp.eq.s32.totalorder %v97, %v154
    %vm160 = vcmp.eq.s32.totalorder %v98, %v154
    %vm161 = vcmp.eq.s32.totalorder %v99, %v154
    %vm162 = vcmp.eq.s32.totalorder %v100, %v154
    %v163 = vsel %vm155, 1, 0
    %v164 = vsel %vm156, 1, 0
    %v165 = vsel %vm157, 1, 0
    %v166 = vsel %vm158, 1, 0
    %v167 = vsel %vm159, 1, 0
    %v168 = vsel %vm160, 1, 0
    %v169 = vsel %vm161, 1, 0
    %v170 = vsel %vm162, 1, 0
    %v171 = vcvt.s32.f32 %v163
    %v172 = vcvt.s32.f32 %v164
    %v173 = vcvt.s32.f32 %v165
    %v174 = vcvt.s32.f32 %v166
    %v175 = vcvt.s32.f32 %v167
    %v176 = vcvt.s32.f32 %v168
    %v177 = vcvt.s32.f32 %v169
    %v178 = vcvt.s32.f32 %v170
    %v179 = vadd.f32 %v127, %v171
    %v180 = vadd.f32 %v128, %v172
    %v181 = vadd.f32 %v129, %v173
    %v182 = vadd.f32 %v130, %v174
    %v183 = vadd.f32 %v131, %v175
    %v184 = vadd.f32 %v132, %v176
    %v185 = vadd.f32 %v133, %v177
    %v186 = vadd.f32 %v134, %v178
    %s187 = sld [smem:[#allocation6 + $0x1]]
    %v188 = vstv %s187
    %v189 = vmul.f32 %v171, %v188
    %v190 = vmul.f32 %v172, %v188
    %v191 = vmul.f32 %v173, %v188
    %v192 = vmul.f32 %v174, %v188
    %v193 = vmul.f32 %v175, %v188
    %v194 = vmul.f32 %v176, %v188
    %v195 = vmul.f32 %v177, %v188
    %v196 = vmul.f32 %v178, %v188
    %v197 = vadd.f32 %v145, %v189
    %v198 = vadd.f32 %v146, %v190
    %v199 = vadd.f32 %v147, %v191
    %v200 = vadd.f32 %v148, %v192
    %v201 = vadd.f32 %v149, %v193
    %v202 = vadd.f32 %v150, %v194
    %v203 = vadd.f32 %v151, %v195
    %v204 = vadd.f32 %v152, %v196
    %s205 = sld [smem:[#allocation3 + $0x2]]
    %v206 = vstv %s205
    %vm207 = vcmp.eq.s32.totalorder %v93, %v206
    %vm208 = vcmp.eq.s32.totalorder %v94, %v206
    %vm209 = vcmp.eq.s32.totalorder %v95, %v206
    %vm210 = vcmp.eq.s32.totalorder %v96, %v206
    %vm211 = vcmp.eq.s32.totalorder %v97, %v206
    %vm212 = vcmp.eq.s32.totalorder %v98, %v206
    %vm213 = vcmp.eq.s32.totalorder %v99, %v206
    %vm214 = vcmp.eq.s32.totalorder %v100, %v206
    %v215 = vsel %vm207, 1, 0
    %v216 = vsel %vm208, 1, 0
    %v217 = vsel %vm209, 1, 0
    %v218 = vsel %vm210, 1, 0
    %v219 = vsel %vm211, 1, 0
    %v220 = vsel %vm212, 1, 0
    %v221 = vsel %vm213, 1, 0
    %v222 = vsel %vm214, 1, 0
    %v223 = vcvt.s32.f32 %v215
    %v224 = vcvt.s32.f32 %v216
    %v225 = vcvt.s32.f32 %v217
    %v226 = vcvt.s32.f32 %v218
    %v227 = vcvt.s32.f32 %v219
    %v228 = vcvt.s32.f32 %v220
    %v229 = vcvt.s32.f32 %v221
    %v230 = vcvt.s32.f32 %v222
    %v231 = vadd.f32 %v179, %v223
    %v232 = vadd.f32 %v180, %v224
    %v233 = vadd.f32 %v181, %v225
    %v234 = vadd.f32 %v182, %v226
    %v235 = vadd.f32 %v183, %v227
    %v236 = vadd.f32 %v184, %v228
    %v237 = vadd.f32 %v185, %v229
    %v238 = vadd.f32 %v186, %v230
    %s239 = sld [smem:[#allocation6 + $0x2]]
    %v240 = vstv %s239
    %v241 = vmul.f32 %v223, %v240
    %v242 = vmul.f32 %v224, %v240
    %v243 = vmul.f32 %v225, %v240
    %v244 = vmul.f32 %v226, %v240
    %v245 = vmul.f32 %v227, %v240
    %v246 = vmul.f32 %v228, %v240
    %v247 = vmul.f32 %v229, %v240
    %v248 = vmul.f32 %v230, %v240
    %v249 = vadd.f32 %v197, %v241
    %v250 = vadd.f32 %v198, %v242
    %v251 = vadd.f32 %v199, %v243
    %v252 = vadd.f32 %v200, %v244
    %v253 = vadd.f32 %v201, %v245
    %v254 = vadd.f32 %v202, %v246
    %v255 = vadd.f32 %v203, %v247
    %v256 = vadd.f32 %v204, %v248
    %s257 = sld [smem:[#allocation3 + $0x3]]
    %v258 = vstv %s257
    %vm259 = vcmp.eq.s32.totalorder %v93, %v258
    %vm260 = vcmp.eq.s32.totalorder %v94, %v258
    %vm261 = vcmp.eq.s32.totalorder %v95, %v258
    %vm262 = vcmp.eq.s32.totalorder %v96, %v258
    %vm263 = vcmp.eq.s32.totalorder %v97, %v258
    %vm264 = vcmp.eq.s32.totalorder %v98, %v258
    %vm265 = vcmp.eq.s32.totalorder %v99, %v258
    %vm266 = vcmp.eq.s32.totalorder %v100, %v258
    %v267 = vsel %vm259, 1, 0
    %v268 = vsel %vm260, 1, 0
    %v269 = vsel %vm261, 1, 0
    %v270 = vsel %vm262, 1, 0
    %v271 = vsel %vm263, 1, 0
    %v272 = vsel %vm264, 1, 0
    %v273 = vsel %vm265, 1, 0
    %v274 = vsel %vm266, 1, 0
    %v275 = vcvt.s32.f32 %v267
    %v276 = vcvt.s32.f32 %v268
    %v277 = vcvt.s32.f32 %v269
    %v278 = vcvt.s32.f32 %v270
    %v279 = vcvt.s32.f32 %v271
    %v280 = vcvt.s32.f32 %v272
    %v281 = vcvt.s32.f32 %v273
    %v282 = vcvt.s32.f32 %v274
    %v283 = vadd.f32 %v231, %v275
    %v284 = vadd.f32 %v232, %v276
    %v285 = vadd.f32 %v233, %v277
    %v286 = vadd.f32 %v234, %v278
    %v287 = vadd.f32 %v235, %v279
    %v288 = vadd.f32 %v236, %v280
    %v289 = vadd.f32 %v237, %v281
    %v290 = vadd.f32 %v238, %v282
    %s291 = sld [smem:[#allocation6 + $0x3]]
    %v292 = vstv %s291
    %v293 = vmul.f32 %v275, %v292
    %v294 = vmul.f32 %v276, %v292
    %v295 = vmul.f32 %v277, %v292
    %v296 = vmul.f32 %v278, %v292
    %v297 = vmul.f32 %v279, %v292
    %v298 = vmul.f32 %v280, %v292
    %v299 = vmul.f32 %v281, %v292
    %v300 = vmul.f32 %v282, %v292
    %v301 = vadd.f32 %v249, %v293
    %v302 = vadd.f32 %v250, %v294
    %v303 = vadd.f32 %v251, %v295
    %v304 = vadd.f32 %v252, %v296
    %v305 = vadd.f32 %v253, %v297
    %v306 = vadd.f32 %v254, %v298
    %v307 = vadd.f32 %v255, %v299
    %v308 = vadd.f32 %v256, %v300
    %s309 = sld [smem:[#allocation3 + $0x4]]
    %v310 = vstv %s309
    %vm311 = vcmp.eq.s32.totalorder %v93, %v310
    %vm312 = vcmp.eq.s32.totalorder %v94, %v310
    %vm313 = vcmp.eq.s32.totalorder %v95, %v310
    %vm314 = vcmp.eq.s32.totalorder %v96, %v310
    %vm315 = vcmp.eq.s32.totalorder %v97, %v310
    %vm316 = vcmp.eq.s32.totalorder %v98, %v310
    %vm317 = vcmp.eq.s32.totalorder %v99, %v310
    %vm318 = vcmp.eq.s32.totalorder %v100, %v310
    %v319 = vsel %vm311, 1, 0
    %v320 = vsel %vm312, 1, 0
    %v321 = vsel %vm313, 1, 0
    %v322 = vsel %vm314, 1, 0
    %v323 = vsel %vm315, 1, 0
    %v324 = vsel %vm316, 1, 0
    %v325 = vsel %vm317, 1, 0
    %v326 = vsel %vm318, 1, 0
    %v327 = vcvt.s32.f32 %v319
    %v328 = vcvt.s32.f32 %v320
    %v329 = vcvt.s32.f32 %v321
    %v330 = vcvt.s32.f32 %v322
    %v331 = vcvt.s32.f32 %v323
    %v332 = vcvt.s32.f32 %v324
    %v333 = vcvt.s32.f32 %v325
    %v334 = vcvt.s32.f32 %v326
    %v335 = vadd.f32 %v283, %v327
    %v336 = vadd.f32 %v284, %v328
    %v337 = vadd.f32 %v285, %v329
    %v338 = vadd.f32 %v286, %v330
    %v339 = vadd.f32 %v287, %v331
    %v340 = vadd.f32 %v288, %v332
    %v341 = vadd.f32 %v289, %v333
    %v342 = vadd.f32 %v290, %v334
    %s343 = sld [smem:[#allocation6 + $0x4]]
    %v344 = vstv %s343
    %v345 = vmul.f32 %v327, %v344
    %v346 = vmul.f32 %v328, %v344
    %v347 = vmul.f32 %v329, %v344
    %v348 = vmul.f32 %v330, %v344
    %v349 = vmul.f32 %v331, %v344
    %v350 = vmul.f32 %v332, %v344
    %v351 = vmul.f32 %v333, %v344
    %v352 = vmul.f32 %v334, %v344
    %v353 = vadd.f32 %v301, %v345
    %v354 = vadd.f32 %v302, %v346
    %v355 = vadd.f32 %v303, %v347
    %v356 = vadd.f32 %v304, %v348
    %v357 = vadd.f32 %v305, %v349
    %v358 = vadd.f32 %v306, %v350
    %v359 = vadd.f32 %v307, %v351
    %v360 = vadd.f32 %v308, %v352
    %s361 = sld [smem:[#allocation3 + $0x5]]
    %v362 = vstv %s361
    %vm363 = vcmp.eq.s32.totalorder %v93, %v362
    %vm364 = vcmp.eq.s32.totalorder %v94, %v362
    %vm365 = vcmp.eq.s32.totalorder %v95, %v362
    %vm366 = vcmp.eq.s32.totalorder %v96, %v362
    %vm367 = vcmp.eq.s32.totalorder %v97, %v362
    %vm368 = vcmp.eq.s32.totalorder %v98, %v362
    %vm369 = vcmp.eq.s32.totalorder %v99, %v362
    %vm370 = vcmp.eq.s32.totalorder %v100, %v362
    %v371 = vsel %vm363, 1, 0
    %v372 = vsel %vm364, 1, 0
    %v373 = vsel %vm365, 1, 0
    %v374 = vsel %vm366, 1, 0
    %v375 = vsel %vm367, 1, 0
    %v376 = vsel %vm368, 1, 0
    %v377 = vsel %vm369, 1, 0
    %v378 = vsel %vm370, 1, 0
    %v379 = vcvt.s32.f32 %v371
    %v380 = vcvt.s32.f32 %v372
    %v381 = vcvt.s32.f32 %v373
    %v382 = vcvt.s32.f32 %v374
    %v383 = vcvt.s32.f32 %v375
    %v384 = vcvt.s32.f32 %v376
    %v385 = vcvt.s32.f32 %v377
    %v386 = vcvt.s32.f32 %v378
    %v387 = vadd.f32 %v335, %v379
    %v388 = vadd.f32 %v336, %v380
    %v389 = vadd.f32 %v337, %v381
    %v390 = vadd.f32 %v338, %v382
    %v391 = vadd.f32 %v339, %v383
    %v392 = vadd.f32 %v340, %v384
    %v393 = vadd.f32 %v341, %v385
    %v394 = vadd.f32 %v342, %v386
    %s395 = sld [smem:[#allocation6 + $0x5]]
    %v396 = vstv %s395
    %v397 = vmul.f32 %v379, %v396
    %v398 = vmul.f32 %v380, %v396
    %v399 = vmul.f32 %v381, %v396
    %v400 = vmul.f32 %v382, %v396
    %v401 = vmul.f32 %v383, %v396
    %v402 = vmul.f32 %v384, %v396
    %v403 = vmul.f32 %v385, %v396
    %v404 = vmul.f32 %v386, %v396
    %v405 = vadd.f32 %v353, %v397
    %v406 = vadd.f32 %v354, %v398
    %v407 = vadd.f32 %v355, %v399
    %v408 = vadd.f32 %v356, %v400
    %v409 = vadd.f32 %v357, %v401
    %v410 = vadd.f32 %v358, %v402
    %v411 = vadd.f32 %v359, %v403
    %v412 = vadd.f32 %v360, %v404
    %s413 = sld [smem:[#allocation3 + $0x6]]
    %v414 = vstv %s413
    %vm415 = vcmp.eq.s32.totalorder %v93, %v414
    %vm416 = vcmp.eq.s32.totalorder %v94, %v414
    %vm417 = vcmp.eq.s32.totalorder %v95, %v414
    %vm418 = vcmp.eq.s32.totalorder %v96, %v414
    %vm419 = vcmp.eq.s32.totalorder %v97, %v414
    %vm420 = vcmp.eq.s32.totalorder %v98, %v414
    %vm421 = vcmp.eq.s32.totalorder %v99, %v414
    %vm422 = vcmp.eq.s32.totalorder %v100, %v414
    %v423 = vsel %vm415, 1, 0
    %v424 = vsel %vm416, 1, 0
    %v425 = vsel %vm417, 1, 0
    %v426 = vsel %vm418, 1, 0
    %v427 = vsel %vm419, 1, 0
    %v428 = vsel %vm420, 1, 0
    %v429 = vsel %vm421, 1, 0
    %v430 = vsel %vm422, 1, 0
    %v431 = vcvt.s32.f32 %v423
    %v432 = vcvt.s32.f32 %v424
    %v433 = vcvt.s32.f32 %v425
    %v434 = vcvt.s32.f32 %v426
    %v435 = vcvt.s32.f32 %v427
    %v436 = vcvt.s32.f32 %v428
    %v437 = vcvt.s32.f32 %v429
    %v438 = vcvt.s32.f32 %v430
    %v439 = vadd.f32 %v387, %v431
    %v440 = vadd.f32 %v388, %v432
    %v441 = vadd.f32 %v389, %v433
    %v442 = vadd.f32 %v390, %v434
    %v443 = vadd.f32 %v391, %v435
    %v444 = vadd.f32 %v392, %v436
    %v445 = vadd.f32 %v393, %v437
    %v446 = vadd.f32 %v394, %v438
    %s447 = sld [smem:[#allocation6 + $0x6]]
    %v448 = vstv %s447
    %v449 = vmul.f32 %v431, %v448
    %v450 = vmul.f32 %v432, %v448
    %v451 = vmul.f32 %v433, %v448
    %v452 = vmul.f32 %v434, %v448
    %v453 = vmul.f32 %v435, %v448
    %v454 = vmul.f32 %v436, %v448
    %v455 = vmul.f32 %v437, %v448
    %v456 = vmul.f32 %v438, %v448
    %v457 = vadd.f32 %v405, %v449
    %v458 = vadd.f32 %v406, %v450
    %v459 = vadd.f32 %v407, %v451
    %v460 = vadd.f32 %v408, %v452
    %v461 = vadd.f32 %v409, %v453
    %v462 = vadd.f32 %v410, %v454
    %v463 = vadd.f32 %v411, %v455
    %v464 = vadd.f32 %v412, %v456
    %s465 = sld [smem:[#allocation3 + $0x7]]
    %v466 = vstv %s465
    %vm467 = vcmp.eq.s32.totalorder %v93, %v466
    %vm468 = vcmp.eq.s32.totalorder %v94, %v466
    %vm469 = vcmp.eq.s32.totalorder %v95, %v466
    %vm470 = vcmp.eq.s32.totalorder %v96, %v466
    %vm471 = vcmp.eq.s32.totalorder %v97, %v466
    %vm472 = vcmp.eq.s32.totalorder %v98, %v466
    %vm473 = vcmp.eq.s32.totalorder %v99, %v466
    %vm474 = vcmp.eq.s32.totalorder %v100, %v466
    %v475 = vsel %vm467, 1, 0
    %v476 = vsel %vm468, 1, 0
    %v477 = vsel %vm469, 1, 0
    %v478 = vsel %vm470, 1, 0
    %v479 = vsel %vm471, 1, 0
    %v480 = vsel %vm472, 1, 0
    %v481 = vsel %vm473, 1, 0
    %v482 = vsel %vm474, 1, 0
    %v483 = vcvt.s32.f32 %v475
    %v484 = vcvt.s32.f32 %v476
    %v485 = vcvt.s32.f32 %v477
    %v486 = vcvt.s32.f32 %v478
    %v487 = vcvt.s32.f32 %v479
    %v488 = vcvt.s32.f32 %v480
    %v489 = vcvt.s32.f32 %v481
    %v490 = vcvt.s32.f32 %v482
    %v491 = vadd.f32 %v439, %v483
    %v492 = vadd.f32 %v440, %v484
    %v493 = vadd.f32 %v441, %v485
    %v494 = vadd.f32 %v442, %v486
    %v495 = vadd.f32 %v443, %v487
    %v496 = vadd.f32 %v444, %v488
    %v497 = vadd.f32 %v445, %v489
    %v498 = vadd.f32 %v446, %v490
    %s499 = sld [smem:[#allocation6 + $0x7]]
    %v500 = vstv %s499
    %v501 = vmul.f32 %v483, %v500
    %v502 = vmul.f32 %v484, %v500
    %v503 = vmul.f32 %v485, %v500
    %v504 = vmul.f32 %v486, %v500
    %v505 = vmul.f32 %v487, %v500
    %v506 = vmul.f32 %v488, %v500
    %v507 = vmul.f32 %v489, %v500
    %v508 = vmul.f32 %v490, %v500
    %v509 = vadd.f32 %v457, %v501
    %v510 = vadd.f32 %v458, %v502
    %v511 = vadd.f32 %v459, %v503
    %v512 = vadd.f32 %v460, %v504
    %v513 = vadd.f32 %v461, %v505
    %v514 = vadd.f32 %v462, %v506
    %v515 = vadd.f32 %v463, %v507
    %v516 = vadd.f32 %v464, %v508
    %v517 = vmax.f32 %v70, 0.0
    %v518 = vmax.f32 %v73, 0.0
    %v519 = vmax.f32 %v76, 0.0
    %v520 = vmax.f32 %v79, 0.0
    %v521 = vmax.f32 %v82, 0.0
    %v522 = vmax.f32 %v85, 0.0
    %v523 = vmax.f32 %v88, 0.0
    %v524 = vmax.f32 %v91, 0.0
    %v525 = vand.u32 2147483647, %v70
    %v526 = vand.u32 2147483647, %v73
    %v527 = vand.u32 2147483647, %v76
    %v528 = vand.u32 2147483647, %v79
    %v529 = vand.u32 2147483647, %v82
    %v530 = vand.u32 2147483647, %v85
    %v531 = vand.u32 2147483647, %v88
    %v532 = vand.u32 2147483647, %v91
    %v533 = vsub.f32 0.0, %v525
    %v534 = vsub.f32 0.0, %v526
    %v535 = vsub.f32 0.0, %v527
    %v536 = vsub.f32 0.0, %v528
    %v537 = vsub.f32 0.0, %v529
    %v538 = vsub.f32 0.0, %v530
    %v539 = vsub.f32 0.0, %v531
    %v540 = vsub.f32 0.0, %v532
    %v541 = vmul.f32 %v533, 1.442695
    %v542 = vpow.pop %v541
    %v543 = vmul.f32 %v534, 1.442695
    %v544 = vpow.pop %v543
    %v545 = vmul.f32 %v535, 1.442695
    %v546 = vpow.pop %v545
    %v547 = vmul.f32 %v536, 1.442695
    %v548 = vpow.pop %v547
    %v549 = vmul.f32 %v537, 1.442695
    %v550 = vpow.pop %v549
    %v551 = vmul.f32 %v538, 1.442695
    %v552 = vpow.pop %v551
    %v553 = vmul.f32 %v539, 1.442695
    %v554 = vpow.pop %v553
    %v555 = vmul.f32 %v540, 1.442695
    %v556 = vpow.pop %v555
    %v557 = vadd.f32 %v542, 1.0
    %v558 = vlog2.pop %v557
    %v559 = vmul.f32 %v558, 0.6931472
    %v560 = vmul.f32 -0.5, %v542
    %v561 = vadd.f32 %v560, 1.0
    %v562 = vmul.f32 %v561, %v542
    %v563 = vand.u32 2147483647, %v542
    %vm564 = vcmp.lt.f32.partialorder %v563, 0.0004427343
    %v565 = vsel %vm564, %v562, %v559
    %v566 = vadd.f32 %v544, 1.0
    %v567 = vlog2.pop %v566
    %v568 = vmul.f32 %v567, 0.6931472
    %v569 = vmul.f32 -0.5, %v544
    %v570 = vadd.f32 %v569, 1.0
    %v571 = vmul.f32 %v570, %v544
    %v572 = vand.u32 2147483647, %v544
    %vm573 = vcmp.lt.f32.partialorder %v572, 0.0004427343
    %v574 = vsel %vm573, %v571, %v568
    %v575 = vadd.f32 %v546, 1.0
    %v576 = vlog2.pop %v575
    %v577 = vmul.f32 %v576, 0.6931472
    %v578 = vmul.f32 -0.5, %v546
    %v579 = vadd.f32 %v578, 1.0
    %v580 = vmul.f32 %v579, %v546
    %v581 = vand.u32 2147483647, %v546
    %vm582 = vcmp.lt.f32.partialorder %v581, 0.0004427343
    %v583 = vsel %vm582, %v580, %v577
    %v584 = vadd.f32 %v548, 1.0
    %v585 = vlog2.pop %v584
    %v586 = vmul.f32 %v585, 0.6931472
    %v587 = vmul.f32 -0.5, %v548
    %v588 = vadd.f32 %v587, 1.0
    %v589 = vmul.f32 %v588, %v548
    %v590 = vand.u32 2147483647, %v548
    %vm591 = vcmp.lt.f32.partialorder %v590, 0.0004427343
    %v592 = vsel %vm591, %v589, %v586
    %v593 = vadd.f32 %v550, 1.0
    %v594 = vlog2.pop %v593
    %v595 = vmul.f32 %v594, 0.6931472
    %v596 = vmul.f32 -0.5, %v550
    %v597 = vadd.f32 %v596, 1.0
    %v598 = vmul.f32 %v597, %v550
    %v599 = vand.u32 2147483647, %v550
    %vm600 = vcmp.lt.f32.partialorder %v599, 0.0004427343
    %v601 = vsel %vm600, %v598, %v595
    %v602 = vadd.f32 %v552, 1.0
    %v603 = vlog2.pop %v602
    %v604 = vmul.f32 %v603, 0.6931472
    %v605 = vmul.f32 -0.5, %v552
    %v606 = vadd.f32 %v605, 1.0
    %v607 = vmul.f32 %v606, %v552
    %v608 = vand.u32 2147483647, %v552
    %vm609 = vcmp.lt.f32.partialorder %v608, 0.0004427343
    %v610 = vsel %vm609, %v607, %v604
    %v611 = vadd.f32 %v554, 1.0
    %v612 = vlog2.pop %v611
    %v613 = vmul.f32 %v612, 0.6931472
    %v614 = vmul.f32 -0.5, %v554
    %v615 = vadd.f32 %v614, 1.0
    %v616 = vmul.f32 %v615, %v554
    %v617 = vand.u32 2147483647, %v554
    %vm618 = vcmp.lt.f32.partialorder %v617, 0.0004427343
    %v619 = vsel %vm618, %v616, %v613
    %v620 = vadd.f32 %v556, 1.0
    %v621 = vlog2.pop %v620
    %v622 = vmul.f32 %v621, 0.6931472
    %v623 = vmul.f32 -0.5, %v556
    %v624 = vadd.f32 %v623, 1.0
    %v625 = vmul.f32 %v624, %v556
    %v626 = vand.u32 2147483647, %v556
    %vm627 = vcmp.lt.f32.partialorder %v626, 0.0004427343
    %v628 = vsel %vm627, %v625, %v622
    %v629 = vadd.f32 %v517, %v565
    %v630 = vadd.f32 %v518, %v574
    %v631 = vadd.f32 %v519, %v583
    %v632 = vadd.f32 %v520, %v592
    %v633 = vadd.f32 %v521, %v601
    %v634 = vadd.f32 %v522, %v610
    %v635 = vadd.f32 %v523, %v619
    %v636 = vadd.f32 %v524, %v628
    %v637 = vmul.f32 %v491, %v629
    %v638 = vmul.f32 %v492, %v630
    %v639 = vmul.f32 %v493, %v631
    %v640 = vmul.f32 %v494, %v632
    %v641 = vmul.f32 %v495, %v633
    %v642 = vmul.f32 %v496, %v634
    %v643 = vmul.f32 %v497, %v635
    %v644 = vmul.f32 %v498, %v636
    %v645 = vmul.f32 %v70, %v509
    %v646 = vmul.f32 %v73, %v510
    %v647 = vmul.f32 %v76, %v511
    %v648 = vmul.f32 %v79, %v512
    %v649 = vmul.f32 %v82, %v513
    %v650 = vmul.f32 %v85, %v514
    %v651 = vmul.f32 %v88, %v515
    %v652 = vmul.f32 %v91, %v516
    %v653 = vsub.f32 %v637, %v645
    %v654 = vsub.f32 %v638, %v646
    %v655 = vsub.f32 %v639, %v647
    %v656 = vsub.f32 %v640, %v648
    %v657 = vsub.f32 %v641, %v649
    %v658 = vsub.f32 %v642, %v650
    %v659 = vsub.f32 %v643, %v651
    %v660 = vsub.f32 %v644, %v652
    %vm661 = vcmask 7168
    %v662 = vsel %vm661, %v653, 0.0
    %v663 = vsel %vm661, %v654, 0.0
    %v664 = vadd.f32 %v662, %v663
    %v665 = vsel %vm661, %v655, 0.0
    %v666 = vadd.f32 %v664, %v665
    %v667 = vsel %vm661, %v656, 0.0
    %v668 = vadd.f32 %v666, %v667
    %v669 = vsel %vm661, %v657, 0.0
    %v670 = vadd.f32 %v668, %v669
    %v671 = vsel %vm661, %v658, 0.0
    %v672 = vadd.f32 %v670, %v671
    %v673 = vsel %vm661, %v659, 0.0
    %v674 = vadd.f32 %v672, %v673
    %v675 = vsel %vm661, %v660, 0.0
    %v676 = vadd.f32 %v674, %v675
    %677 = vadd.xlane.f32.xlu0 %v676
    %v678 = vpop.xlane.xlu0 %677
    %v679 = vrot.slane %v678, 4
    %v680 = vadd.f32 %v678, %v679
    %v681 = vrot.slane %v680, 2
    %v682 = vadd.f32 %v680, %v681
    %v683 = vrot.slane %v682, 1
    %v684 = vadd.f32 %v682, %v683
    %s685 = vtos %v684
    %v686 = vmul.f32 %v47, %v47
    %vm687 = vcmask 253952
    %v688 = vsel %vm687, %v686, 0.0
    %689 = vadd.xlane.f32.xlu0 %v688
    %v690 = vpop.xlane.xlu0 %689
    %v691 = vrot.slane %v690, 4
    %v692 = vadd.f32 %v690, %v691
    %v693 = vrot.slane %v692, 2
    %v694 = vadd.f32 %v692, %v693
    %v695 = vrot.slane %v694, 1
    %v696 = vadd.f32 %v694, %v695
    %s697 = vtos %v696
    %v698 = vstv %s697
    %v699 = vrsqrt.pop %v698
    %v700 = vmul.f32 %v699, %v698
    %v701 = vmul.f32 %v700, %v699
    %v702 = vmul.f32 0.5, %v701
    %v703 = vsub.f32 1.5, %v702
    %v704 = vmul.f32 %v699, %v703
    %v705 = vmul.f32 %v698, %v704
    %vm706 = vcmp.eq.f32.partialorder %v698, inf
    %v707 = vsel %vm706, %v698, %v705
    %vm708 = vcmp.eq.f32.partialorder %v698, 0.0
    %v709 = vand.u32 %v698, 2147483648
    %v710 = vsel %vm708, %v709, %v707
    %s711 = vtos %v710
    %s712 = sld [smem:[#allocation2]]
    %s713 = smul.f32 %s712, %s711
    %s714 = sadd.f32 %s685, %s713
    %s715 = scalar_lea.smem [#allocation8], 0
    %716 = sst [smem:[%s715]] %s714
    // Predicated region
    $region30: #{tpu_custom_call.1} parent=1 // pred_check
      _
    $region31: #{tpu_custom_call.1} parent=1 // pred_check_branch
      %718 = sbr.rel (0) target = $region33
    $region32: #{tpu_custom_call.1} parent=1 // pred_region
      %720 = vsyncadd [#allocation4], 0
      %s722 = sshll.u32 %s5, 4
      %s723 = int_to_ptr.hbm [resolvable:$true] %s722
      %725 = dma.smem_to_hbm [#allocation8], 16, %s723, [#allocation4]
    $region33: #{tpu_custom_call.1} parent=1 // pred_fallthru
      _
    // Predicated region
    $region34: #{tpu_custom_call.1} parent=1 // pred_check
      _
    $region35: #{tpu_custom_call.1} parent=1 // pred_check_branch
      %727 = sbr.rel (0) target = $region37
    $region36: #{tpu_custom_call.1} parent=1 // pred_region
      %729 = dma.done [#allocation4], 16
    $region37: #{tpu_custom_call.1} parent=1 // pred_fallthru
      _
    %730 = sfence
    %731 = vsyncpa [#allocation4], 1
    %732 = vsyncpa [#allocation5], 1
    %733 = vsyncpa [#allocation7], 1

</llo_original>
